<compile_context>
chip_gen: v7x
topology: tpu7x:2x2x1
jax: 0.10.0
libtpu: 0.0.40
codegen_flags: <defaults>
</compile_context>

<pallas_src>
import functools
import math

import jax
import jax.numpy as jnp
from jax import lax
from jax.experimental import pallas as pl
from jax.experimental.pallas import tpu as pltpu


def _round_up(x, m):
    return ((x + m - 1) // m) * m


def _block_spec(shape, index_map, *, single_buffer=False):
    """BlockSpec helper; single_buffer=True requests Buffered(1) for
    grid-invariant operands (halves their VMEM; no re-DMA needed)."""
    if single_buffer:
        try:
            return pl.BlockSpec(shape, index_map, pipeline_mode=pl.Buffered(1))
        except (TypeError, AttributeError):
            pass  # older jax: fall back to default double-buffering
    return pl.BlockSpec(shape, index_map)


def _dcnv2_kernel(n_cross, n_hidden, stacked, d, d_out,
                  x_ref, w1_ref, b1_ref,
                  wc_ref, bc_ref,
                  wd_ref, bd_ref,
                  wl_ref, bl_ref,
                  o_ref):
    f32 = jnp.float32
    bf16 = jnp.bfloat16

    def mm(a_f32, w_bf16):
        # bf16 MXU operands, f32 accumulation; elementwise math stays f32.
        return jnp.dot(a_f32.astype(bf16), w_bf16, preferred_element_type=f32)

    # first_linear
    x0 = mm(x_ref[...], w1_ref[...]) + b1_ref[...]

    # cross layers: x_cross = x0 * Linear(x_cross) + x_cross   (dropout = id)
    x_cross = x0
    for i in range(n_cross):
        x_cross = x0 * (mm(x_cross, wc_ref[i]) + bc_ref[i]) + x_cross

    # deep layers: Linear -> ReLU -> Dropout[identity]
    h = x_cross if stacked else x0
    for i in range(n_hidden):
        h = jnp.maximum(mm(h, wd_ref[i]) + bd_ref[i], 0.0)

    # last_linear.  The non-stacked torch.cat([x_cross, h], dim=1) is folded
    # into two partial products against static slices of wl (no lane concat).
    if d_out == 1:
        # VPU matvec head: avoids a 1-column (N=1) MXU dot.
        wl = wl_ref[...].astype(f32)                  # (1, d) or (1, 2d)
        if stacked:
            out = jnp.sum(h * wl, axis=-1, keepdims=True)
        else:
            out = (jnp.sum(x_cross * wl[:, :d], axis=-1, keepdims=True)
                   + jnp.sum(h * wl[:, d:], axis=-1, keepdims=True))
    else:
        # MXU head: contract feature axes directly (a @ wl.T), still no concat.
        dn = (((1,), (1,)), ((), ()))
        wl = wl_ref[...]                              # (d_out, d or 2d) bf16
        if stacked:
            out = lax.dot_general(h.astype(bf16), wl, dn,
                                  preferred_element_type=f32)
        else:
            out = (lax.dot_general(x_cross.astype(bf16), wl[:, :d], dn,
                                   preferred_element_type=f32)
                   + lax.dot_general(h.astype(bf16), wl[:, d:], dn,
                                     preferred_element_type=f32))

    o_ref[...] = (out + bl_ref[...]).astype(o_ref.dtype)


def dcnv2_forward(x, params, *, n_cross, n_hidden, stacked, block_b=256):
    """x: (B, d_in) float32 feature matrix (numeric + flattened embeddings)."""
    w1, b1, wc, bc, wd, bd, wl, bl = params
    B, d_in = x.shape
    d = w1.shape[1]
    d_out = wl.shape[0]

    # Batch tile: multiple of 8 sublanes; use >=256 (v6e/v7x) / mult of 128
    # (v5e) at real batch sizes.  Pad B up to a tile multiple.
    TB = min(block_b, _round_up(max(B, 8), 8))
    B_pad = _round_up(B, TB)
    if B_pad != B:
        x = jnp.pad(x, ((0, B_pad - B), (0, 0)))

    kernel = functools.partial(_dcnv2_kernel, n_cross, n_hidden, stacked, d, d_out)

    def resident(a):
        nd = a.ndim
        return _block_spec(a.shape, lambda i: (0,) * nd, single_buffer=True)

    in_specs = [
        _block_spec((TB, d_in), lambda i: (i, 0)),     # x: batch-tiled
        resident(w1), resident(b1),
        resident(wc), resident(bc),
        resident(wd), resident(bd),
        resident(wl), resident(bl),
    ]

    out = pl.pallas_call(
        kernel,
        out_shape=jax.ShapeDtypeStruct((B_pad, d_out), jnp.float32),
        grid=(B_pad // TB,),
        in_specs=in_specs,
        out_specs=pl.BlockSpec((TB, d_out), lambda i: (i, 0)),
        compiler_params=pltpu.CompilerParams(
            dimension_semantics=("parallel",)),
        # TODO(synk): for large d / many layers, set vmem_limit_bytes here
        # (v5e's default scoped VMEM is only 16 MiB).
    )(x, w1, b1, wc, bc, wd, bd, wl, bl)

    out = out[:B]
    # torch: .squeeze(1)
    return jnp.squeeze(out, axis=1) if d_out == 1 else out


def init_params(key, d_in, d, d_out, n_cross, n_hidden, stacked):
    """Deterministic synthetic init (Kaiming-uniform-like scales).
    Matmul weights stored bf16 (MXU operands); biases stay f32."""
    ks = jax.random.split(key, 4)

    def lin(k, fan_in, fan_out, transpose=True):
        bound = 1.0 / math.sqrt(fan_in)
        kw, kb = jax.random.split(k)
        shape = (fan_in, fan_out) if transpose else (fan_out, fan_in)
        W = jax.random.uniform(kw, shape, jnp.float32, -bound, bound)
        b = jax.random.uniform(kb, (1, fan_out), jnp.float32, -bound, bound)
        return W.astype(jnp.bfloat16), b

    w1, b1 = lin(ks[0], d_in, d)

    wc_l, bc_l = zip(*[lin(jax.random.fold_in(ks[1], i), d, d)
                       for i in range(n_cross)])
    wc, bc = jnp.stack(wc_l), jnp.stack(bc_l)          # (n_cross,d,d),(n_cross,1,d)

    wd_l, bd_l = zip(*[lin(jax.random.fold_in(ks[2], i), d, d)
                       for i in range(n_hidden)])
    wd, bd = jnp.stack(wd_l), jnp.stack(bd_l)          # (n_hidden,d,d),(n_hidden,1,d)

    d_last_in = d if stacked else 2 * d
    wl, bl = lin(ks[3], d_last_in, d_out, transpose=False)  # (d_out, d_last_in)
    return (w1, b1, wc, bc, wd, bd, wl, bl)


def reference_forward(x, params, *, n_cross, n_hidden, stacked):
    """Pure-JAX reference mirroring the PyTorch forward (eval mode) with the
    same bf16-operand / f32-accumulation matmul convention as the kernel."""
    w1, b1, wc, bc, wd, bd, wl, bl = params
    f32, bf16 = jnp.float32, jnp.bfloat16
    mm = lambda a, w: jnp.dot(a.astype(bf16), w, preferred_element_type=f32)
    d = w1.shape[1]
    d_out = wl.shape[0]

    x0 = mm(x, w1) + b1
    xc = x0
    for i in range(n_cross):
        xc = x0 * (mm(xc, wc[i]) + bc[i]) + xc
    h = xc if stacked else x0
    for i in range(n_hidden):
        h = jnp.maximum(mm(h, wd[i]) + bd[i], 0.0)

    wlf = wl.astype(f32)
    if d_out == 1:
        if stacked:
            out = jnp.sum(h * wlf, axis=-1, keepdims=True)
        else:
            out = (jnp.sum(xc * wlf[:, :d], axis=-1, keepdims=True)
                   + jnp.sum(h * wlf[:, d:], axis=-1, keepdims=True))
    else:
        if stacked:
            out = mm(h, wl.T)
        else:
            out = mm(xc, wl[:, :d].T) + mm(h, wl[:, d:].T)
    out = out + bl
    return jnp.squeeze(out, axis=1) if d_out == 1 else out


if __name__ == "__main__":
    key = jax.random.PRNGKey(0)

    # module hyperparameters (small, consistent with __init__)
    d_num = 4
    categories = [3, 5, 7]
    d_embedding = 4
    d = 32
    n_hidden_layers = 2
    n_cross_layers = 2
    d_out = 1
    stacked = False
    B = 48
    block_b = 32   # small tile to exercise multi-tile grid + padding; use >=256 at scale

    d_in = d_num + len(categories) * d_embedding  # 4 + 3*4 = 16

    k_emb, k_num, k_cat, k_par = jax.random.split(key, 4)

    # category embedding table + offsets (plain-JAX glue, as in the module)
    emb_weight = jax.random.uniform(
        k_emb, (sum(categories), d_embedding), jnp.float32, -0.5, 0.5)
    category_offsets = jnp.cumsum(jnp.array([0] + categories[:-1], jnp.int32))

    # example inputs
    x_num = jax.random.normal(k_num, (B, d_num), jnp.float32)
    x_cat = jnp.stack(
        [jax.random.randint(jax.random.fold_in(k_cat, i), (B,), 0, c)
         for i, c in enumerate(categories)], axis=1).astype(jnp.int32)

    # embedding lookup + feature concat (glue)
    emb = jnp.take(emb_weight, x_cat + category_offsets[None], axis=0)  # (B, n_cat, d_emb)
    x = jnp.concatenate([x_num, emb.reshape(B, -1)], axis=-1)           # (B, d_in)

    params = init_params(k_par, d_in, d, d_out,
                         n_cross_layers, n_hidden_layers, stacked)

    out = dcnv2_forward(x, params, n_cross=n_cross_layers,
                        n_hidden=n_hidden_layers, stacked=stacked,
                        block_b=block_b)
    out = jax.block_until_ready(out)

    ref = reference_forward(x, params, n_cross=n_cross_layers,
                            n_hidden=n_hidden_layers, stacked=stacked)
    assert out.shape == (B,), out.shape
    assert jnp.allclose(out, ref, atol=2e-2, rtol=2e-2), (out, ref)

    print("KERNEL_OK")
</pallas_src>

<mosaic_0001>
module attributes {stable_mosaic.version = 11 : i64} {
  func.func @_dcnv2_kernel(%arg0: i32, %arg1: memref<32x16xf32, #tpu.memory_space<vmem>>, %arg2: memref<16x32xbf16, #tpu.memory_space<vmem>>, %arg3: memref<1x32xf32, #tpu.memory_space<vmem>>, %arg4: memref<2x32x32xbf16, #tpu.memory_space<vmem>>, %arg5: memref<2x1x32xf32, #tpu.memory_space<vmem>>, %arg6: memref<2x32x32xbf16, #tpu.memory_space<vmem>>, %arg7: memref<2x1x32xf32, #tpu.memory_space<vmem>>, %arg8: memref<1x64xbf16, #tpu.memory_space<vmem>>, %arg9: memref<1x1xf32, #tpu.memory_space<vmem>>, %arg10: memref<32x1xf32, #tpu.memory_space<vmem>>) attributes {dimension_semantics = [#tpu.dimension_semantics<parallel>], iteration_bounds = array<i64: 2>, scalar_prefetch = 0 : i64, scratch_operands = 0 : i64, tpu.core_type = #tpu.core_type<tc>, window_params = [{transform_indices = @transform_0, window_bounds = array<i64: 32, 16>}, {pipeline_mode = #tpu.pipeline_mode<synchronous>, transform_indices = @transform_1, window_bounds = array<i64: 16, 32>}, {pipeline_mode = #tpu.pipeline_mode<synchronous>, transform_indices = @transform_2, window_bounds = array<i64: 1, 32>}, {pipeline_mode = #tpu.pipeline_mode<synchronous>, transform_indices = @transform_3, window_bounds = array<i64: 2, 32, 32>}, {pipeline_mode = #tpu.pipeline_mode<synchronous>, transform_indices = @transform_4, window_bounds = array<i64: 2, 1, 32>}, {pipeline_mode = #tpu.pipeline_mode<synchronous>, transform_indices = @transform_5, window_bounds = array<i64: 2, 32, 32>}, {pipeline_mode = #tpu.pipeline_mode<synchronous>, transform_indices = @transform_6, window_bounds = array<i64: 2, 1, 32>}, {pipeline_mode = #tpu.pipeline_mode<synchronous>, transform_indices = @transform_7, window_bounds = array<i64: 1, 64>}, {pipeline_mode = #tpu.pipeline_mode<synchronous>, transform_indices = @transform_8, window_bounds = array<i64: 1, 1>}, {transform_indices = @transform_9, window_bounds = array<i64: 32, 1>}]} {
    %c0 = arith.constant 0 : index
    %c0_0 = arith.constant 0 : index
    %0 = vector.load %arg1[%c0, %c0_0] : memref<32x16xf32, #tpu.memory_space<vmem>>, vector<32x16xf32>
    %c0_1 = arith.constant 0 : index
    %c0_2 = arith.constant 0 : index
    %1 = vector.load %arg2[%c0_1, %c0_2] : memref<16x32xbf16, #tpu.memory_space<vmem>>, vector<16x32xbf16>
    %2 = arith.truncf %0 : vector<32x16xf32> to vector<32x16xbf16>
    %cst = arith.constant dense<0.000000e+00> : vector<32x32xf32>
    %3 = tpu.matmul %2, %1, %cst {dimension_numbers = #tpu.dot_dimension_numbers<[1], [0], [0], [1], [0, 0, 1, 1], [], []>} : vector<32x16xbf16>, vector<16x32xbf16>, vector<32x32xf32> -> vector<32x32xf32>
    %c0_3 = arith.constant 0 : index
    %c0_4 = arith.constant 0 : index
    %4 = vector.load %arg3[%c0_3, %c0_4] : memref<1x32xf32, #tpu.memory_space<vmem>>, vector<1x32xf32>
    %5 = vector.broadcast %4 : vector<1x32xf32> to vector<32x32xf32>
    %6 = arith.addf %3, %5 : vector<32x32xf32>
    %c0_5 = arith.constant 0 : index
    %c0_6 = arith.constant 0 : index
    %c0_7 = arith.constant 0 : index
    %7 = vector.load %arg4[%c0_5, %c0_6, %c0_7] : memref<2x32x32xbf16, #tpu.memory_space<vmem>>, vector<1x32x32xbf16>
    %8 = vector.shape_cast %7 : vector<1x32x32xbf16> to vector<32x32xbf16>
    %9 = arith.truncf %6 : vector<32x32xf32> to vector<32x32xbf16>
    %cst_8 = arith.constant dense<0.000000e+00> : vector<32x32xf32>
    %10 = tpu.matmul %9, %8, %cst_8 {dimension_numbers = #tpu.dot_dimension_numbers<[1], [0], [0], [1], [0, 0, 1, 1], [], []>} : vector<32x32xbf16>, vector<32x32xbf16>, vector<32x32xf32> -> vector<32x32xf32>
    %c0_9 = arith.constant 0 : index
    %c0_10 = arith.constant 0 : index
    %c0_11 = arith.constant 0 : index
    %11 = vector.load %arg5[%c0_9, %c0_10, %c0_11] : memref<2x1x32xf32, #tpu.memory_space<vmem>>, vector<1x1x32xf32>
    %12 = vector.shape_cast %11 : vector<1x1x32xf32> to vector<1x32xf32>
    %13 = vector.broadcast %12 : vector<1x32xf32> to vector<32x32xf32>
    %14 = arith.addf %10, %13 : vector<32x32xf32>
    %15 = arith.mulf %6, %14 : vector<32x32xf32>
    %16 = arith.addf %15, %6 : vector<32x32xf32>
    %c1 = arith.constant 1 : index
    %c0_12 = arith.constant 0 : index
    %c0_13 = arith.constant 0 : index
    %17 = vector.load %arg4[%c1, %c0_12, %c0_13] : memref<2x32x32xbf16, #tpu.memory_space<vmem>>, vector<1x32x32xbf16>
    %18 = vector.shape_cast %17 : vector<1x32x32xbf16> to vector<32x32xbf16>
    %19 = arith.truncf %16 : vector<32x32xf32> to vector<32x32xbf16>
    %cst_14 = arith.constant dense<0.000000e+00> : vector<32x32xf32>
    %20 = tpu.matmul %19, %18, %cst_14 {dimension_numbers = #tpu.dot_dimension_numbers<[1], [0], [0], [1], [0, 0, 1, 1], [], []>} : vector<32x32xbf16>, vector<32x32xbf16>, vector<32x32xf32> -> vector<32x32xf32>
    %c1_15 = arith.constant 1 : index
    %c0_16 = arith.constant 0 : index
    %c0_17 = arith.constant 0 : index
    %21 = vector.load %arg5[%c1_15, %c0_16, %c0_17] : memref<2x1x32xf32, #tpu.memory_space<vmem>>, vector<1x1x32xf32>
    %22 = vector.shape_cast %21 : vector<1x1x32xf32> to vector<1x32xf32>
    %23 = vector.broadcast %22 : vector<1x32xf32> to vector<32x32xf32>
    %24 = arith.addf %20, %23 : vector<32x32xf32>
    %25 = arith.mulf %6, %24 : vector<32x32xf32>
    %26 = arith.addf %25, %16 : vector<32x32xf32>
    %c0_18 = arith.constant 0 : index
    %c0_19 = arith.constant 0 : index
    %c0_20 = arith.constant 0 : index
    %27 = vector.load %arg6[%c0_18, %c0_19, %c0_20] : memref<2x32x32xbf16, #tpu.memory_space<vmem>>, vector<1x32x32xbf16>
    %28 = vector.shape_cast %27 : vector<1x32x32xbf16> to vector<32x32xbf16>
    %29 = arith.truncf %6 : vector<32x32xf32> to vector<32x32xbf16>
    %cst_21 = arith.constant dense<0.000000e+00> : vector<32x32xf32>
    %30 = tpu.matmul %29, %28, %cst_21 {dimension_numbers = #tpu.dot_dimension_numbers<[1], [0], [0], [1], [0, 0, 1, 1], [], []>} : vector<32x32xbf16>, vector<32x32xbf16>, vector<32x32xf32> -> vector<32x32xf32>
    %c0_22 = arith.constant 0 : index
    %c0_23 = arith.constant 0 : index
    %c0_24 = arith.constant 0 : index
    %31 = vector.load %arg7[%c0_22, %c0_23, %c0_24] : memref<2x1x32xf32, #tpu.memory_space<vmem>>, vector<1x1x32xf32>
    %32 = vector.shape_cast %31 : vector<1x1x32xf32> to vector<1x32xf32>
    %33 = vector.broadcast %32 : vector<1x32xf32> to vector<32x32xf32>
    %34 = arith.addf %30, %33 : vector<32x32xf32>
    %cst_25 = arith.constant 0.000000e+00 : f32
    %35 = vector.broadcast %cst_25 : f32 to vector<32x32xf32>
    %36 = arith.maximumf %34, %35 : vector<32x32xf32>
    %c1_26 = arith.constant 1 : index
    %c0_27 = arith.constant 0 : index
    %c0_28 = arith.constant 0 : index
    %37 = vector.load %arg6[%c1_26, %c0_27, %c0_28] : memref<2x32x32xbf16, #tpu.memory_space<vmem>>, vector<1x32x32xbf16>
    %38 = vector.shape_cast %37 : vector<1x32x32xbf16> to vector<32x32xbf16>
    %39 = arith.truncf %36 : vector<32x32xf32> to vector<32x32xbf16>
    %cst_29 = arith.constant dense<0.000000e+00> : vector<32x32xf32>
    %40 = tpu.matmul %39, %38, %cst_29 {dimension_numbers = #tpu.dot_dimension_numbers<[1], [0], [0], [1], [0, 0, 1, 1], [], []>} : vector<32x32xbf16>, vector<32x32xbf16>, vector<32x32xf32> -> vector<32x32xf32>
    %c1_30 = arith.constant 1 : index
    %c0_31 = arith.constant 0 : index
    %c0_32 = arith.constant 0 : index
    %41 = vector.load %arg7[%c1_30, %c0_31, %c0_32] : memref<2x1x32xf32, #tpu.memory_space<vmem>>, vector<1x1x32xf32>
    %42 = vector.shape_cast %41 : vector<1x1x32xf32> to vector<1x32xf32>
    %43 = vector.broadcast %42 : vector<1x32xf32> to vector<32x32xf32>
    %44 = arith.addf %40, %43 : vector<32x32xf32>
    %cst_33 = arith.constant 0.000000e+00 : f32
    %45 = vector.broadcast %cst_33 : f32 to vector<32x32xf32>
    %46 = arith.maximumf %44, %45 : vector<32x32xf32>
    %c0_34 = arith.constant 0 : index
    %c0_35 = arith.constant 0 : index
    %47 = vector.load %arg8[%c0_34, %c0_35] : memref<1x64xbf16, #tpu.memory_space<vmem>>, vector<1x64xbf16>
    %48 = arith.extf %47 : vector<1x64xbf16> to vector<1x64xf32>
    %49 = vector.extract_strided_slice %48 {offsets = [0, 0], sizes = [1, 32], strides = [1, 1]} : vector<1x64xf32> to vector<1x32xf32>
    %50 = vector.broadcast %49 : vector<1x32xf32> to vector<32x32xf32>
    %51 = arith.mulf %26, %50 : vector<32x32xf32>
    %cst_36 = arith.constant dense<0.000000e+00> : vector<32xf32>
    %52 = vector.multi_reduction <add>, %51, %cst_36 [1] : vector<32x32xf32> to vector<32xf32>
    %53 = vector.shape_cast %52 : vector<32xf32> to vector<32x1xf32>
    %54 = vector.extract_strided_slice %48 {offsets = [0, 32], sizes = [1, 32], strides = [1, 1]} : vector<1x64xf32> to vector<1x32xf32>
    %55 = vector.broadcast %54 : vector<1x32xf32> to vector<32x32xf32>
    %56 = arith.mulf %46, %55 : vector<32x32xf32>
    %cst_37 = arith.constant dense<0.000000e+00> : vector<32xf32>
    %57 = vector.multi_reduction <add>, %56, %cst_37 [1] : vector<32x32xf32> to vector<32xf32>
    %58 = vector.shape_cast %57 : vector<32xf32> to vector<32x1xf32>
    %59 = arith.addf %53, %58 : vector<32x1xf32>
    %c0_38 = arith.constant 0 : index
    %c0_39 = arith.constant 0 : index
    %60 = vector.load %arg9[%c0_38, %c0_39] : memref<1x1xf32, #tpu.memory_space<vmem>>, vector<1x1xf32>
    %61 = vector.broadcast %60 : vector<1x1xf32> to vector<32x1xf32>
    %62 = arith.addf %59, %61 : vector<32x1xf32>
    %c0_40 = arith.constant 0 : index
    %c0_41 = arith.constant 0 : index
    %63 = vector.load %arg10[%c0_40, %c0_41] : memref<32x1xf32, #tpu.memory_space<vmem>>, vector<32x1xf32>
    tpu.vector_store %arg10[%c0_40, %c0_41], %62 {strides = array<i32>} : memref<32x1xf32, #tpu.memory_space<vmem>>, vector<32x1xf32>,
    return
  }
  func.func @transform_0(%arg0: i32) -> (i32, i32) {
    %c0_i32 = arith.constant 0 : i32
    %c0_i32_0 = arith.constant 0 : i32
    return %arg0, %c0_i32 : i32, i32
  }
  func.func @transform_1(%arg0: i32) -> (i32, i32) {
    %c0_i32 = arith.constant 0 : i32
    %c0_i32_0 = arith.constant 0 : i32
    %c0_i32_1 = arith.constant 0 : i32
    return %c0_i32, %c0_i32_0 : i32, i32
  }
  func.func @transform_2(%arg0: i32) -> (i32, i32) {
    %c0_i32 = arith.constant 0 : i32
    %c0_i32_0 = arith.constant 0 : i32
    %c0_i32_1 = arith.constant 0 : i32
    return %c0_i32, %c0_i32_0 : i32, i32
  }
  func.func @transform_3(%arg0: i32) -> (i32, i32, i32) {
    %c0_i32 = arith.constant 0 : i32
    %c0_i32_0 = arith.constant 0 : i32
    %c0_i32_1 = arith.constant 0 : i32
    %c0_i32_2 = arith.constant 0 : i32
    return %c0_i32, %c0_i32_0, %c0_i32_1 : i32, i32, i32
  }
  func.func @transform_4(%arg0: i32) -> (i32, i32, i32) {
    %c0_i32 = arith.constant 0 : i32
    %c0_i32_0 = arith.constant 0 : i32
    %c0_i32_1 = arith.constant 0 : i32
    %c0_i32_2 = arith.constant 0 : i32
    return %c0_i32, %c0_i32_0, %c0_i32_1 : i32, i32, i32
  }
  func.func @transform_5(%arg0: i32) -> (i32, i32, i32) {
    %c0_i32 = arith.constant 0 : i32
    %c0_i32_0 = arith.constant 0 : i32
    %c0_i32_1 = arith.constant 0 : i32
    %c0_i32_2 = arith.constant 0 : i32
    return %c0_i32, %c0_i32_0, %c0_i32_1 : i32, i32, i32
  }
  func.func @transform_6(%arg0: i32) -> (i32, i32, i32) {
    %c0_i32 = arith.constant 0 : i32
    %c0_i32_0 = arith.constant 0 : i32
    %c0_i32_1 = arith.constant 0 : i32
    %c0_i32_2 = arith.constant 0 : i32
    return %c0_i32, %c0_i32_0, %c0_i32_1 : i32, i32, i32
  }
  func.func @transform_7(%arg0: i32) -> (i32, i32) {
    %c0_i32 = arith.constant 0 : i32
    %c0_i32_0 = arith.constant 0 : i32
    %c0_i32_1 = arith.constant 0 : i32
    return %c0_i32, %c0_i32_0 : i32, i32
  }
  func.func @transform_8(%arg0: i32) -> (i32, i32) {
    %c0_i32 = arith.constant 0 : i32
    %c0_i32_0 = arith.constant 0 : i32
    %c0_i32_1 = arith.constant 0 : i32
    return %c0_i32, %c0_i32_0 : i32, i32
  }
  func.func @transform_9(%arg0: i32) -> (i32, i32) {
    %c0_i32 = arith.constant 0 : i32
    %c0_i32_0 = arith.constant 0 : i32
    return %arg0, %c0_i32 : i32, i32
  }
}

</mosaic_0001>

<llo_original>
// kernel: tpu_custom_call.1
$region0: #{tpu_custom_call.1}
  #allocation0 [shape = 'u32[]', space=smem, size = 0x4, offset = 0x4, fixed_abs, tag = 'smem constant byte address 0x4 - core index']
  #allocation1 [shape = 'u32[144,128]{1,0:T(1,128)}', space=vmem, size = 0x12000, scoped, tag = 'internal scratch']
  #allocation2 [shape = 'f32[1,1]{1,0:T(1,128)S(1)}', space=vmem, size = 0x200, scoped, tag = 'scoped memory for tpu_custom_call.1']
  %s0 = inlined_call_operand.vmem [shape: f32[64,16], index: 0, kind: input, shape index: {}]
  %s1 = inlined_call_operand.vmem [shape: bf16[16,32], index: 1, kind: input, shape index: {}]
  %s2 = inlined_call_operand.vmem [shape: f32[1,32], index: 2, kind: input, shape index: {}]
  %s3 = inlined_call_operand.vmem [shape: bf16[2,32,32], index: 3, kind: input, shape index: {}]
  %s4 = inlined_call_operand.vmem [shape: f32[2,1,32], index: 4, kind: input, shape index: {}]
  %s5 = inlined_call_operand.vmem [shape: bf16[2,32,32], index: 5, kind: input, shape index: {}]
  %s6 = inlined_call_operand.vmem [shape: f32[2,1,32], index: 6, kind: input, shape index: {}]
  %s7 = inlined_call_operand.vmem [shape: bf16[1,64], index: 7, kind: input, shape index: {}]
  %s8 = inlined_call_operand.<no memory space> [shape: f32[1,1], index: 8, kind: input, shape index: {}]
  %s9 = inlined_call_operand.vmem [shape: f32[64,1], index: 9, kind: output, shape index: {}]
  %s10 = sld [smem:[#allocation0]]
  $region69: #{tpu_custom_call.1} parent=0
    _
  %s12 = ssub.s32 1, %s10
  %s13 = scalar_select 0, %s12, %s10
  %v14 = vstv %s8
  %15 = vst [vmem:[#allocation2] sm:$0x1] %v14
  loop: start=0, step=1, limit=4
  $region2: #{tpu_custom_call.1} parent=0 // loop_pre_header
    _
  $region3: #{tpu_custom_call.1} parent=0 // loop_header
    %s17 = sphi 0, %s21
    %p18 = scmp.ge.s32.totalorder %s17, 4
    %s27 = sphi 0, %s29
    %s30 = sphi 0, %s27
    %s31 = sphi 0, %s30
    %s47 = sphi 0, %s31
    %s51 = sphi 0, %s51
    %s53 = sphi 0, %s51
    %s54 = sphi 0, %s53
    %s68 = sphi 0, %s54
    %s72 = sphi 0, %s72
    %s74 = sphi 0, %s72
    %s75 = sphi 0, %s74
    %s89 = sphi 0, %s75
    %s93 = sphi 0, %s93
    %s95 = sphi 0, %s93
    %s96 = sphi 0, %s95
    %s110 = sphi 0, %s96
    %s114 = sphi 0, %s114
    %s116 = sphi 0, %s114
    %s117 = sphi 0, %s116
    %s131 = sphi 0, %s117
    %s135 = sphi 0, %s135
    %s137 = sphi 0, %s135
    %s138 = sphi 0, %s137
    %s152 = sphi 0, %s138
    %s156 = sphi 0, %s156
    %s158 = sphi 0, %s156
    %s159 = sphi 0, %s158
    %s173 = sphi 0, %s159
    %s177 = sphi 0, %s177
    %s179 = sphi 0, %s177
    %s180 = sphi 0, %s179
    %s194 = sphi 0, %s180
    %s198 = sphi 0, %s198
    %s200 = sphi 0, %s198
    %s201 = sphi 0, %s200
    %s215 = sphi 0, %s201
    %s221 = sphi 0, %s223
    %s224 = sphi 0, %s221
    %s225 = sphi 0, %s224
    %s241 = sphi 0, %s225
  $region4: #{tpu_custom_call.1} parent=0 // loop_header_branch
    %20 = sbr.rel (%p18) target = $region8
  $region5: #{tpu_custom_call.1} parent=0 // loop_body
    %s22 = ssub.s32 %s17, 1
    %s23 = ssub.s32 %s17, 2
    %s24 = sadd.s32 %s17, 1
    %s25 = ssub.s32 %s17, %s24
    %p26 = scmp.eq.s32.totalorder %s25, 0
    %s28 = sadd.s32 %s27, 1
    %s29 = scalar_select %p26, %s27, %s28
    %p32 = pneg %p26
    %p33 = scmp.eq.s32.totalorder %s17, 1
    %p34 = por %p32, %p33
    %p35 = scmp.ne.s32.totalorder %s27, %s30
    %p36 = scmp.eq.s32.totalorder %s17, 0
    %p37 = por %p35, %p36
    %p38 = scmp.ne.s32.totalorder %s27, %s30
    %p39 = scmp.eq.s32.totalorder %s22, 1
    %p40 = por %p38, %p39
    %p41 = scmp.ne.s32.totalorder %s30, %s31
    %p42 = scmp.eq.s32.totalorder %s22, 0
    %p43 = por %p41, %p42
    %p44 = scmp.ne.s32.totalorder %s30, %s31
    %p45 = scmp.eq.s32.totalorder %s23, 1
    %p46 = por %p44, %p45
    %p48 = scmp.ne.s32.totalorder %s31, %s47
    %p49 = scmp.eq.s32.totalorder %s23, 0
    %p50 = por %p48, %p49
    %s52 = sadd.s32 %s51, 1
    %p55 = scmp.eq.s32.totalorder %s17, 1
    %p56 = scmp.ne.s32.totalorder %s51, %s53
    %p57 = scmp.eq.s32.totalorder %s17, 0
    %p58 = por %p56, %p57
    %p59 = scmp.ne.s32.totalorder %s51, %s53
    %p60 = scmp.eq.s32.totalorder %s22, 1
    %p61 = por %p59, %p60
    %p62 = scmp.ne.s32.totalorder %s53, %s54
    %p63 = scmp.eq.s32.totalorder %s22, 0
    %p64 = por %p62, %p63
    %p65 = scmp.ne.s32.totalorder %s53, %s54
    %p66 = scmp.eq.s32.totalorder %s23, 1
    %p67 = por %p65, %p66
    %p69 = scmp.ne.s32.totalorder %s54, %s68
    %p70 = scmp.eq.s32.totalorder %s23, 0
    %p71 = por %p69, %p70
    %s73 = sadd.s32 %s72, 1
    %p76 = scmp.eq.s32.totalorder %s17, 1
    %p77 = scmp.ne.s32.totalorder %s72, %s74
    %p78 = scmp.eq.s32.totalorder %s17, 0
    %p79 = por %p77, %p78
    %p80 = scmp.ne.s32.totalorder %s72, %s74
    %p81 = scmp.eq.s32.totalorder %s22, 1
    %p82 = por %p80, %p81
    %p83 = scmp.ne.s32.totalorder %s74, %s75
    %p84 = scmp.eq.s32.totalorder %s22, 0
    %p85 = por %p83, %p84
    %p86 = scmp.ne.s32.totalorder %s74, %s75
    %p87 = scmp.eq.s32.totalorder %s23, 1
    %p88 = por %p86, %p87
    %p90 = scmp.ne.s32.totalorder %s75, %s89
    %p91 = scmp.eq.s32.totalorder %s23, 0
    %p92 = por %p90, %p91
    %s94 = sadd.s32 %s93, 1
    %p97 = scmp.eq.s32.totalorder %s17, 1
    %p98 = scmp.ne.s32.totalorder %s93, %s95
    %p99 = scmp.eq.s32.totalorder %s17, 0
    %p100 = por %p98, %p99
    %p101 = scmp.ne.s32.totalorder %s93, %s95
    %p102 = scmp.eq.s32.totalorder %s22, 1
    %p103 = por %p101, %p102
    %p104 = scmp.ne.s32.totalorder %s95, %s96
    %p105 = scmp.eq.s32.totalorder %s22, 0
    %p106 = por %p104, %p105
    %p107 = scmp.ne.s32.totalorder %s95, %s96
    %p108 = scmp.eq.s32.totalorder %s23, 1
    %p109 = por %p107, %p108
    %p111 = scmp.ne.s32.totalorder %s96, %s110
    %p112 = scmp.eq.s32.totalorder %s23, 0
    %p113 = por %p111, %p112
    %s115 = sadd.s32 %s114, 1
    %p118 = scmp.eq.s32.totalorder %s17, 1
    %p119 = scmp.ne.s32.totalorder %s114, %s116
    %p120 = scmp.eq.s32.totalorder %s17, 0
    %p121 = por %p119, %p120
    %p122 = scmp.ne.s32.totalorder %s114, %s116
    %p123 = scmp.eq.s32.totalorder %s22, 1
    %p124 = por %p122, %p123
    %p125 = scmp.ne.s32.totalorder %s116, %s117
    %p126 = scmp.eq.s32.totalorder %s22, 0
    %p127 = por %p125, %p126
    %p128 = scmp.ne.s32.totalorder %s116, %s117
    %p129 = scmp.eq.s32.totalorder %s23, 1
    %p130 = por %p128, %p129
    %p132 = scmp.ne.s32.totalorder %s117, %s131
    %p133 = scmp.eq.s32.totalorder %s23, 0
    %p134 = por %p132, %p133
    %s136 = sadd.s32 %s135, 1
    %p139 = scmp.eq.s32.totalorder %s17, 1
    %p140 = scmp.ne.s32.totalorder %s135, %s137
    %p141 = scmp.eq.s32.totalorder %s17, 0
    %p142 = por %p140, %p141
    %p143 = scmp.ne.s32.totalorder %s135, %s137
    %p144 = scmp.eq.s32.totalorder %s22, 1
    %p145 = por %p143, %p144
    %p146 = scmp.ne.s32.totalorder %s137, %s138
    %p147 = scmp.eq.s32.totalorder %s22, 0
    %p148 = por %p146, %p147
    %p149 = scmp.ne.s32.totalorder %s137, %s138
    %p150 = scmp.eq.s32.totalorder %s23, 1
    %p151 = por %p149, %p150
    %p153 = scmp.ne.s32.totalorder %s138, %s152
    %p154 = scmp.eq.s32.totalorder %s23, 0
    %p155 = por %p153, %p154
    %s157 = sadd.s32 %s156, 1
    %p160 = scmp.eq.s32.totalorder %s17, 1
    %p161 = scmp.ne.s32.totalorder %s156, %s158
    %p162 = scmp.eq.s32.totalorder %s17, 0
    %p163 = por %p161, %p162
    %p164 = scmp.ne.s32.totalorder %s156, %s158
    %p165 = scmp.eq.s32.totalorder %s22, 1
    %p166 = por %p164, %p165
    %p167 = scmp.ne.s32.totalorder %s158, %s159
    %p168 = scmp.eq.s32.totalorder %s22, 0
    %p169 = por %p167, %p168
    %p170 = scmp.ne.s32.totalorder %s158, %s159
    %p171 = scmp.eq.s32.totalorder %s23, 1
    %p172 = por %p170, %p171
    %p174 = scmp.ne.s32.totalorder %s159, %s173
    %p175 = scmp.eq.s32.totalorder %s23, 0
    %p176 = por %p174, %p175
    %s178 = sadd.s32 %s177, 1
    %p181 = scmp.eq.s32.totalorder %s17, 1
    %p182 = scmp.ne.s32.totalorder %s177, %s179
    %p183 = scmp.eq.s32.totalorder %s17, 0
    %p184 = por %p182, %p183
    %p185 = scmp.ne.s32.totalorder %s177, %s179
    %p186 = scmp.eq.s32.totalorder %s22, 1
    %p187 = por %p185, %p186
    %p188 = scmp.ne.s32.totalorder %s179, %s180
    %p189 = scmp.eq.s32.totalorder %s22, 0
    %p190 = por %p188, %p189
    %p191 = scmp.ne.s32.totalorder %s179, %s180
    %p192 = scmp.eq.s32.totalorder %s23, 1
    %p193 = por %p191, %p192
    %p195 = scmp.ne.s32.totalorder %s180, %s194
    %p196 = scmp.eq.s32.totalorder %s23, 0
    %p197 = por %p195, %p196
    %s199 = sadd.s32 %s198, 1
    %p202 = scmp.eq.s32.totalorder %s17, 1
    %p203 = scmp.ne.s32.totalorder %s198, %s200
    %p204 = scmp.eq.s32.totalorder %s17, 0
    %p205 = por %p203, %p204
    %p206 = scmp.ne.s32.totalorder %s198, %s200
    %p207 = scmp.eq.s32.totalorder %s22, 1
    %p208 = por %p206, %p207
    %p209 = scmp.ne.s32.totalorder %s200, %s201
    %p210 = scmp.eq.s32.totalorder %s22, 0
    %p211 = por %p209, %p210
    %p212 = scmp.ne.s32.totalorder %s200, %s201
    %p213 = scmp.eq.s32.totalorder %s23, 1
    %p214 = por %p212, %p213
    %p216 = scmp.ne.s32.totalorder %s201, %s215
    %p217 = scmp.eq.s32.totalorder %s23, 0
    %p218 = por %p216, %p217
    %s219 = ssub.s32 %s17, %s24
    %p220 = scmp.eq.s32.totalorder %s219, 0
    %s222 = sadd.s32 %s221, 1
    %s223 = scalar_select %p220, %s221, %s222
    %p226 = pneg %p220
    %p227 = scmp.eq.s32.totalorder %s17, 1
    %p228 = por %p226, %p227
    %p229 = scmp.ne.s32.totalorder %s221, %s224
    %p230 = scmp.eq.s32.totalorder %s17, 0
    %p231 = por %p229, %p230
    %p232 = scmp.ne.s32.totalorder %s221, %s224
    %p233 = scmp.eq.s32.totalorder %s22, 1
    %p234 = por %p232, %p233
    %p235 = scmp.ne.s32.totalorder %s224, %s225
    %p236 = scmp.eq.s32.totalorder %s22, 0
    %p237 = por %p235, %p236
    %p238 = scmp.ne.s32.totalorder %s224, %s225
    %p239 = scmp.eq.s32.totalorder %s23, 1
    %p240 = por %p238, %p239
    %p242 = scmp.ne.s32.totalorder %s225, %s241
    %p243 = scmp.eq.s32.totalorder %s23, 0
    %p244 = por %p242, %p243
    %p245 = scmp.le.s32.totalorder 1, %s17
    %p246 = scmp.lt.s32.totalorder %s17, 3
    %p247 = pnand %p245, %p246
    %p248 = pneg %p247
    // Predicated region
    $region9: #{tpu_custom_call.1} parent=5 // pred_check
      _
    $region10: #{tpu_custom_call.1} parent=5 // pred_check_branch
      %250 = sbr.rel (%p247) target = $region12
    $region11: #{tpu_custom_call.1} parent=5 // pred_region
      %s251 = ssub.s32 %s17, 1
      // Predicated region
      $region13: #{tpu_custom_call.1} parent=11 // pred_check
        %p252 = pneg %p64
      $region14: #{tpu_custom_call.1} parent=11 // pred_check_branch
        %254 = sbr.rel (%p252) target = $region16
      $region15: #{tpu_custom_call.1} parent=11 // pred_region
        _
      $region16: #{tpu_custom_call.1} parent=11 // pred_fallthru
        _
      // Predicated region
      $region17: #{tpu_custom_call.1} parent=11 // pred_check
        %p255 = pneg %p85
      $region18: #{tpu_custom_call.1} parent=11 // pred_check_branch
        %257 = sbr.rel (%p255) target = $region20
      $region19: #{tpu_custom_call.1} parent=11 // pred_region
        _
      $region20: #{tpu_custom_call.1} parent=11 // pred_fallthru
        _
      // Predicated region
      $region21: #{tpu_custom_call.1} parent=11 // pred_check
        %p258 = pneg %p106
      $region22: #{tpu_custom_call.1} parent=11 // pred_check_branch
        %260 = sbr.rel (%p258) target = $region24
      $region23: #{tpu_custom_call.1} parent=11 // pred_region
        _
      $region24: #{tpu_custom_call.1} parent=11 // pred_fallthru
        _
      // Predicated region
      $region25: #{tpu_custom_call.1} parent=11 // pred_check
        %p261 = pneg %p127
      $region26: #{tpu_custom_call.1} parent=11 // pred_check_branch
        %263 = sbr.rel (%p261) target = $region28
      $region27: #{tpu_custom_call.1} parent=11 // pred_region
        _
      $region28: #{tpu_custom_call.1} parent=11 // pred_fallthru
        _
      // Predicated region
      $region29: #{tpu_custom_call.1} parent=11 // pred_check
        %p264 = pneg %p148
      $region30: #{tpu_custom_call.1} parent=11 // pred_check_branch
        %266 = sbr.rel (%p264) target = $region32
      $region31: #{tpu_custom_call.1} parent=11 // pred_region
        _
      $region32: #{tpu_custom_call.1} parent=11 // pred_fallthru
        _
      // Predicated region
      $region33: #{tpu_custom_call.1} parent=11 // pred_check
        %p267 = pneg %p169
      $region34: #{tpu_custom_call.1} parent=11 // pred_check_branch
        %269 = sbr.rel (%p267) target = $region36
      $region35: #{tpu_custom_call.1} parent=11 // pred_region
        _
      $region36: #{tpu_custom_call.1} parent=11 // pred_fallthru
        _
      // Predicated region
      $region37: #{tpu_custom_call.1} parent=11 // pred_check
        %p270 = pneg %p190
      $region38: #{tpu_custom_call.1} parent=11 // pred_check_branch
        %272 = sbr.rel (%p270) target = $region40
      $region39: #{tpu_custom_call.1} parent=11 // pred_region
        _
      $region40: #{tpu_custom_call.1} parent=11 // pred_fallthru
        _
      // Predicated region
      $region41: #{tpu_custom_call.1} parent=11 // pred_check
        %p273 = pneg %p211
      $region42: #{tpu_custom_call.1} parent=11 // pred_check_branch
        %275 = sbr.rel (%p273) target = $region44
      $region43: #{tpu_custom_call.1} parent=11 // pred_region
        _
      $region44: #{tpu_custom_call.1} parent=11 // pred_fallthru
        _
    $region12: #{tpu_custom_call.1} parent=5 // pred_fallthru
      _
    %p276 = scmp.lt.s32.totalorder %s17, 2
    // Predicated region
    $region45: #{tpu_custom_call.1} parent=5 // pred_check
      %p277 = pneg %p276
    $region46: #{tpu_custom_call.1} parent=5 // pred_check_branch
      %279 = sbr.rel (%p277) target = $region48
    $region47: #{tpu_custom_call.1} parent=5 // pred_region
      // Predicated region
      $region49: #{tpu_custom_call.1} parent=47 // pred_check
        %p280 = pneg %p37
      $region50: #{tpu_custom_call.1} parent=47 // pred_check_branch
        %282 = sbr.rel (%p280) target = $region52
      $region51: #{tpu_custom_call.1} parent=47 // pred_region
        %s283 = smul.u32 4, %s17
        %p284 = scmp.lt.s32.totalorder %s283, 7
        %s285 = scalar_select %p284, %s283, 7
        %s286 = smul.addr %s285, 8
        %s287 = scalar_lea.vmem %s0, %s286
        %s288 = smul.u32 4, %s17
      $region52: #{tpu_custom_call.1} parent=47 // pred_fallthru
        _
    $region48: #{tpu_custom_call.1} parent=5 // pred_fallthru
      _
    %p289 = scmp.le.s32.totalorder 1, %s17
    %p290 = scmp.lt.s32.totalorder %s17, 3
    %p291 = pnand %p289, %p290
    %p292 = pneg %p291
    // Predicated region
    $region53: #{tpu_custom_call.1} parent=5 // pred_check
      _
    $region54: #{tpu_custom_call.1} parent=5 // pred_check_branch
      %294 = sbr.rel (%p291) target = $region56
    $region55: #{tpu_custom_call.1} parent=5 // pred_region
      %s295 = ssub.s32 %s17, 1
      %s296 = smul.u32 4, %s22
      %p297 = scmp.lt.s32.totalorder %s296, 7
      %s298 = scalar_select %p297, %s296, 7
      %s299 = smul.addr %s298, 8
      %s300 = scalar_lea.vmem %s0, %s299
      %p301 = pneg %p43
      %p302 = pneg %p40
      %p303 = pneg %p64
      %p304 = pneg %p61
      %p305 = pneg %p85
      %p306 = pneg %p82
      %p307 = pneg %p106
      %p308 = pneg %p103
      %p309 = pneg %p127
      %p310 = pneg %p124
      %p311 = pneg %p148
      %p312 = pneg %p145
      %p313 = pneg %p169
      %p314 = pneg %p166
      %p315 = pneg %p190
      %p316 = pneg %p187
      %p317 = pneg %p211
      %p318 = pneg %p208
      %p319 = pneg %p237
      %p320 = pneg %p234
      %s321 = smul.u32 4, %s22
      %p322 = scmp.lt.s32.totalorder %s321, 7
      %s323 = scalar_select %p322, %s321, 7
      %s324 = smul.addr %s323, 8
      %s325 = scalar_lea.vmem %s9, %s324
      %s326 = smul.u32 4, %s22
      %p327 = scmp.lt.s32.totalorder %s326, 7
      %s328 = scalar_select %p327, %s326, 7
      %s329 = smul.addr %s328, 8
      %s330 = scalar_lea.vmem %s0, %s329
      %s331 = smul.u32 4, %s22
      %s332 = smul.u32 4, %s22
      %p333 = scmp.lt.s32.totalorder %s332, 7
      %s334 = scalar_select %p333, %s332, 7
      %s335 = smul.addr %s334, 8
      %s336 = scalar_lea.vmem %s9, %s335
      %s337 = smul.u32 4, %s22
      %v339 = vld [vmem:[%s330] sm:$0xff]
      %v340 = vld [vmem:[%s330 + $0x8] sm:$0xff]
      %v341 = vld [vmem:[%s330 + $0x10] sm:$0xff]
      %v342 = vld [vmem:[%s330 + $0x18] sm:$0xff]
      %v343 = vld [vmem:[%s1] sm:$0xf]
      %v344 = vld [vmem:[%s1 + $0x4] sm:$0xf]
      %v345 = vpack.c.bf16 %v340, %v339
      %v346 = vpack.c.bf16 %v342, %v341
      %v347 = vld [vmem:[%s2] sm:$0x1]
      %v349 = vlaneseq
      %v350 = vshrl.u32 %v349, 7
      %v351 = vsub.s32 0, %v350
      %v352 = vrot.slane %v347, %v351
      %v356 = vunpack.c.l.b16 %v343
      %v357 = vunpack.c.l.b16 %v344
      %v358 = vpack.c.b16 %v357, %v356
      %vm360 = vcmask 130048
      %v362 = vsel %vm360, %v345, 0
      %v365 = vsel %vm360, %v346, 0
      %367 = vmatprep.subr.bf16.mxu0 0
      %368 = vmatpush1.bf16.msra.mxu0 %v358
      %369 = vmatprep.subr.bf16.mxu0 0
      %370 = vmatpush1.bf16.msra.mxu0 0
      %371 = vmatprep.subr.bf16.mxu0 0
      %372 = vmatpush1.bf16.msra.mxu0 0
      %373 = vmatprep.subr.bf16.mxu0 0
      %374 = vmatpush1.bf16.msra.mxu0 0
      %375 = vmatprep.subr.bf16.mxu0 0
      %376 = vmatpush1.bf16.msra.mxu0 0
      %377 = vmatprep.subr.bf16.mxu0 0
      %378 = vmatpush1.bf16.msra.mxu0 0
      %379 = vmatprep.subr.bf16.mxu0 0
      %380 = vmatpush1.bf16.msra.mxu0 0
      %381 = vmatprep.subr.bf16.mxu0 0
      %382 = vmatpush1.bf16.msra.mxu0 0
      %383 = vmatprep.subr.bf16.mxu0 0
      %384 = vmatpush1.bf16.msra.mxu0 0
      %385 = vmatprep.subr.bf16.mxu0 0
      %386 = vmatpush1.bf16.msra.mxu0 0
      %387 = vmatprep.subr.bf16.mxu0 0
      %388 = vmatpush1.bf16.msra.mxu0 0
      %389 = vmatprep.subr.bf16.mxu0 0
      %390 = vmatpush1.bf16.msra.mxu0 0
      %391 = vmatprep.subr.bf16.mxu0 0
      %392 = vmatpush1.bf16.msra.mxu0 0
      %393 = vmatprep.subr.bf16.mxu0 0
      %394 = vmatpush1.bf16.msra.mxu0 0
      %395 = vmatprep.subr.bf16.mxu0 0
      %396 = vmatpush1.bf16.msra.mxu0 0
      %397 = vmatprep.subr.bf16.mxu0 0
      %398 = vmatpush1.bf16.msra.mxu0 0
      %399 = vmatprep.mubr.bf16.mxu0 0
      %400 = vmatmul.mubr.bf16.gmra.mrb[0].mxu0 %v362
      %v401 = vpop.f32.mrb[0].mxu0
      %v402 = vadd.f32 %v352, %v401
      %v403 = vpop.f32.mrb[0].mxu0
      %v404 = vpop.f32.mrb[0].mxu0
      %v405 = vadd.f32 %v352, %v404
      %v406 = vpop.f32.mrb[0].mxu0
      %407 = vmatprep.mubr.bf16.mxu0 0
      %408 = vmatmul.mubr.bf16.gmra.mrb[0].mxu0 %v365
      %v409 = vpop.f32.mrb[0].mxu0
      %v410 = vadd.f32 %v352, %v409
      %v411 = vpop.f32.mrb[0].mxu0
      %v412 = vpop.f32.mrb[0].mxu0
      %v413 = vadd.f32 %v352, %v412
      %v414 = vpop.f32.mrb[0].mxu0
      %415 = vdwg.mxu0
      %v416 = vld [vmem:[%s3] sm:$0xf]
      %v417 = vld [vmem:[%s3 + $0x4] sm:$0xf]
      %v418 = vld [vmem:[%s3 + $0x8] sm:$0xf]
      %v419 = vld [vmem:[%s3 + $0xc] sm:$0xf]
      %v420 = vpack.c.bf16 %v405, %v402
      %v421 = vpack.c.bf16 %v413, %v410
      %v422 = vld [vmem:[%s4] sm:$0x1]
      %v424 = vlaneseq
      %v425 = vshrl.u32 %v424, 7
      %v426 = vsub.s32 0, %v425
      %v427 = vrot.slane %v422, %v426
      %v433 = vunpack.c.l.b16 %v416
      %v434 = vunpack.c.l.b16 %v417
      %v435 = vunpack.c.l.b16 %v418
      %v436 = vunpack.c.l.b16 %v419
      %v437 = vpack.c.b16 %v434, %v433
      %v438 = vpack.c.b16 %v436, %v435
      %vm441 = vcmask 261120
      %v443 = vsel %vm441, %v420, 0
      %v446 = vsel %vm441, %v421, 0
      %448 = vmatprep.subr.bf16.mxu0 0
      %449 = vmatpush1.bf16.msra.mxu0 %v437
      %450 = vmatprep.subr.bf16.mxu0 0
      %451 = vmatpush1.bf16.msra.mxu0 %v438
      %452 = vmatprep.subr.bf16.mxu0 0
      %453 = vmatpush1.bf16.msra.mxu0 0
      %454 = vmatprep.subr.bf16.mxu0 0
      %455 = vmatpush1.bf16.msra.mxu0 0
      %456 = vmatprep.subr.bf16.mxu0 0
      %457 = vmatpush1.bf16.msra.mxu0 0
      %458 = vmatprep.subr.bf16.mxu0 0
      %459 = vmatpush1.bf16.msra.mxu0 0
      %460 = vmatprep.subr.bf16.mxu0 0
      %461 = vmatpush1.bf16.msra.mxu0 0
      %462 = vmatprep.subr.bf16.mxu0 0
      %463 = vmatpush1.bf16.msra.mxu0 0
      %464 = vmatprep.subr.bf16.mxu0 0
      %465 = vmatpush1.bf16.msra.mxu0 0
      %466 = vmatprep.subr.bf16.mxu0 0
      %467 = vmatpush1.bf16.msra.mxu0 0
      %468 = vmatprep.subr.bf16.mxu0 0
      %469 = vmatpush1.bf16.msra.mxu0 0
      %470 = vmatprep.subr.bf16.mxu0 0
      %471 = vmatpush1.bf16.msra.mxu0 0
      %472 = vmatprep.subr.bf16.mxu0 0
      %473 = vmatpush1.bf16.msra.mxu0 0
      %474 = vmatprep.subr.bf16.mxu0 0
      %475 = vmatpush1.bf16.msra.mxu0 0
      %476 = vmatprep.subr.bf16.mxu0 0
      %477 = vmatpush1.bf16.msra.mxu0 0
      %478 = vmatprep.subr.bf16.mxu0 0
      %479 = vmatpush1.bf16.msra.mxu0 0
      %480 = vmatprep.mubr.bf16.mxu0 0
      %481 = vmatmul.mubr.bf16.gmra.mrb[0].mxu0 %v443
      %v482 = vpop.f32.mrb[0].mxu0
      %v483 = vadd.f32 %v427, %v482
      %v484 = vpop.f32.mrb[0].mxu0
      %v485 = vpop.f32.mrb[0].mxu0
      %v486 = vadd.f32 %v427, %v485
      %v487 = vpop.f32.mrb[0].mxu0
      %488 = vmatprep.mubr.bf16.mxu0 0
      %489 = vmatmul.mubr.bf16.gmra.mrb[0].mxu0 %v446
      %v490 = vpop.f32.mrb[0].mxu0
      %v491 = vadd.f32 %v427, %v490
      %v492 = vpop.f32.mrb[0].mxu0
      %v493 = vpop.f32.mrb[0].mxu0
      %v494 = vadd.f32 %v427, %v493
      %v495 = vpop.f32.mrb[0].mxu0
      %496 = vdwg.mxu0
      %v497 = vmul.f32 %v402, %v483
      %v498 = vmul.f32 %v405, %v486
      %v499 = vmul.f32 %v410, %v491
      %v500 = vmul.f32 %v413, %v494
      %v501 = vadd.f32 %v497, %v402
      %v502 = vadd.f32 %v498, %v405
      %v503 = vadd.f32 %v499, %v410
      %v504 = vadd.f32 %v500, %v413
      %s505 = scalar_lea.vmem %s3, 16
      %v506 = vld [vmem:[%s505] sm:$0xf]
      %v507 = vld [vmem:[%s505 + $0x4] sm:$0xf]
      %v508 = vld [vmem:[%s505 + $0x8] sm:$0xf]
      %v509 = vld [vmem:[%s505 + $0xc] sm:$0xf]
      %v510 = vpack.c.bf16 %v502, %v501
      %v511 = vpack.c.bf16 %v504, %v503
      %s512 = scalar_lea.vmem %s4, 1
      %v513 = vld [vmem:[%s512] sm:$0x1]
      %v515 = vlaneseq
      %v516 = vshrl.u32 %v515, 7
      %v517 = vsub.s32 0, %v516
      %v518 = vrot.slane %v513, %v517
      %v524 = vunpack.c.l.b16 %v506
      %v525 = vunpack.c.l.b16 %v507
      %v526 = vunpack.c.l.b16 %v508
      %v527 = vunpack.c.l.b16 %v509
      %v528 = vpack.c.b16 %v525, %v524
      %v529 = vpack.c.b16 %v527, %v526
      %v533 = vsel %vm441, %v510, 0
      %v536 = vsel %vm441, %v511, 0
      %538 = vmatprep.subr.bf16.mxu0 0
      %539 = vmatpush1.bf16.msra.mxu0 %v528
      %540 = vmatprep.subr.bf16.mxu0 0
      %541 = vmatpush1.bf16.msra.mxu0 %v529
      %542 = vmatprep.subr.bf16.mxu0 0
      %543 = vmatpush1.bf16.msra.mxu0 0
      %544 = vmatprep.subr.bf16.mxu0 0
      %545 = vmatpush1.bf16.msra.mxu0 0
      %546 = vmatprep.subr.bf16.mxu0 0
      %547 = vmatpush1.bf16.msra.mxu0 0
      %548 = vmatprep.subr.bf16.mxu0 0
      %549 = vmatpush1.bf16.msra.mxu0 0
      %550 = vmatprep.subr.bf16.mxu0 0
      %551 = vmatpush1.bf16.msra.mxu0 0
      %552 = vmatprep.subr.bf16.mxu0 0
      %553 = vmatpush1.bf16.msra.mxu0 0
      %554 = vmatprep.subr.bf16.mxu0 0
      %555 = vmatpush1.bf16.msra.mxu0 0
      %556 = vmatprep.subr.bf16.mxu0 0
      %557 = vmatpush1.bf16.msra.mxu0 0
      %558 = vmatprep.subr.bf16.mxu0 0
      %559 = vmatpush1.bf16.msra.mxu0 0
      %560 = vmatprep.subr.bf16.mxu0 0
      %561 = vmatpush1.bf16.msra.mxu0 0
      %562 = vmatprep.subr.bf16.mxu0 0
      %563 = vmatpush1.bf16.msra.mxu0 0
      %564 = vmatprep.subr.bf16.mxu0 0
      %565 = vmatpush1.bf16.msra.mxu0 0
      %566 = vmatprep.subr.bf16.mxu0 0
      %567 = vmatpush1.bf16.msra.mxu0 0
      %568 = vmatprep.subr.bf16.mxu0 0
      %569 = vmatpush1.bf16.msra.mxu0 0
      %570 = vmatprep.mubr.bf16.mxu0 0
      %571 = vmatmul.mubr.bf16.gmra.mrb[0].mxu0 %v533
      %v572 = vpop.f32.mrb[0].mxu0
      %v573 = vadd.f32 %v518, %v572
      %v574 = vpop.f32.mrb[0].mxu0
      %v575 = vpop.f32.mrb[0].mxu0
      %v576 = vadd.f32 %v518, %v575
      %v577 = vpop.f32.mrb[0].mxu0
      %578 = vmatprep.mubr.bf16.mxu0 0
      %579 = vmatmul.mubr.bf16.gmra.mrb[0].mxu0 %v536
      %v580 = vpop.f32.mrb[0].mxu0
      %v581 = vadd.f32 %v518, %v580
      %v582 = vpop.f32.mrb[0].mxu0
      %v583 = vpop.f32.mrb[0].mxu0
      %v584 = vadd.f32 %v518, %v583
      %v585 = vpop.f32.mrb[0].mxu0
      %586 = vdwg.mxu0
      %v587 = vmul.f32 %v402, %v573
      %v588 = vmul.f32 %v405, %v576
      %v589 = vmul.f32 %v410, %v581
      %v590 = vmul.f32 %v413, %v584
      %v591 = vadd.f32 %v587, %v501
      %v592 = vadd.f32 %v588, %v502
      %v593 = vadd.f32 %v589, %v503
      %v594 = vadd.f32 %v590, %v504
      %v595 = vld [vmem:[%s5] sm:$0xf]
      %v596 = vld [vmem:[%s5 + $0x4] sm:$0xf]
      %v597 = vld [vmem:[%s5 + $0x8] sm:$0xf]
      %v598 = vld [vmem:[%s5 + $0xc] sm:$0xf]
      %v599 = vld [vmem:[%s6] sm:$0x1]
      %v601 = vlaneseq
      %v602 = vshrl.u32 %v601, 7
      %v603 = vsub.s32 0, %v602
      %v604 = vrot.slane %v599, %v603
      %v610 = vunpack.c.l.b16 %v595
      %v611 = vunpack.c.l.b16 %v596
      %v612 = vunpack.c.l.b16 %v597
      %v613 = vunpack.c.l.b16 %v598
      %v614 = vpack.c.b16 %v611, %v610
      %v615 = vpack.c.b16 %v613, %v612
      %618 = vmatprep.subr.bf16.mxu0 0
      %619 = vmatpush1.bf16.msra.mxu0 %v614
      %620 = vmatprep.subr.bf16.mxu0 0
      %621 = vmatpush1.bf16.msra.mxu0 %v615
      %622 = vmatprep.subr.bf16.mxu0 0
      %623 = vmatpush1.bf16.msra.mxu0 0
      %624 = vmatprep.subr.bf16.mxu0 0
      %625 = vmatpush1.bf16.msra.mxu0 0
      %626 = vmatprep.subr.bf16.mxu0 0
      %627 = vmatpush1.bf16.msra.mxu0 0
      %628 = vmatprep.subr.bf16.mxu0 0
      %629 = vmatpush1.bf16.msra.mxu0 0
      %630 = vmatprep.subr.bf16.mxu0 0
      %631 = vmatpush1.bf16.msra.mxu0 0
      %632 = vmatprep.subr.bf16.mxu0 0
      %633 = vmatpush1.bf16.msra.mxu0 0
      %634 = vmatprep.subr.bf16.mxu0 0
      %635 = vmatpush1.bf16.msra.mxu0 0
      %636 = vmatprep.subr.bf16.mxu0 0
      %637 = vmatpush1.bf16.msra.mxu0 0
      %638 = vmatprep.subr.bf16.mxu0 0
      %639 = vmatpush1.bf16.msra.mxu0 0
      %640 = vmatprep.subr.bf16.mxu0 0
      %641 = vmatpush1.bf16.msra.mxu0 0
      %642 = vmatprep.subr.bf16.mxu0 0
      %643 = vmatpush1.bf16.msra.mxu0 0
      %644 = vmatprep.subr.bf16.mxu0 0
      %645 = vmatpush1.bf16.msra.mxu0 0
      %646 = vmatprep.subr.bf16.mxu0 0
      %647 = vmatpush1.bf16.msra.mxu0 0
      %648 = vmatprep.subr.bf16.mxu0 0
      %649 = vmatpush1.bf16.msra.mxu0 0
      %650 = vmatprep.mubr.bf16.mxu0 0
      %651 = vmatmul.mubr.bf16.gmra.mrb[0].mxu0 %v443
      %v652 = vpop.f32.mrb[0].mxu0
      %v653 = vadd.f32 %v604, %v652
      %v654 = vpop.f32.mrb[0].mxu0
      %v655 = vpop.f32.mrb[0].mxu0
      %v656 = vadd.f32 %v604, %v655
      %v657 = vpop.f32.mrb[0].mxu0
      %658 = vmatprep.mubr.bf16.mxu0 0
      %659 = vmatmul.mubr.bf16.gmra.mrb[0].mxu0 %v446
      %v660 = vpop.f32.mrb[0].mxu0
      %v661 = vadd.f32 %v604, %v660
      %v662 = vpop.f32.mrb[0].mxu0
      %v663 = vpop.f32.mrb[0].mxu0
      %v664 = vadd.f32 %v604, %v663
      %v665 = vpop.f32.mrb[0].mxu0
      %666 = vdwg.mxu0
      %v667 = vmax.f32 %v653, 0.0
      %v668 = vmax.f32 %v656, 0.0
      %v669 = vmax.f32 %v661, 0.0
      %v670 = vmax.f32 %v664, 0.0
      %s671 = scalar_lea.vmem %s5, 16
      %v672 = vld [vmem:[%s671] sm:$0xf]
      %v673 = vld [vmem:[%s671 + $0x4] sm:$0xf]
      %v674 = vld [vmem:[%s671 + $0x8] sm:$0xf]
      %v675 = vld [vmem:[%s671 + $0xc] sm:$0xf]
      %v676 = vpack.c.bf16 %v668, %v667
      %v677 = vpack.c.bf16 %v670, %v669
      %s678 = scalar_lea.vmem %s6, 1
      %v679 = vld [vmem:[%s678] sm:$0x1]
      %v681 = vlaneseq
      %v682 = vshrl.u32 %v681, 7
      %v683 = vsub.s32 0, %v682
      %v684 = vrot.slane %v679, %v683
      %v690 = vunpack.c.l.b16 %v672
      %v691 = vunpack.c.l.b16 %v673
      %v692 = vunpack.c.l.b16 %v674
      %v693 = vunpack.c.l.b16 %v675
      %v694 = vpack.c.b16 %v691, %v690
      %v695 = vpack.c.b16 %v693, %v692
      %v699 = vsel %vm441, %v676, 0
      %v702 = vsel %vm441, %v677, 0
      %704 = vmatprep.subr.bf16.mxu0 0
      %705 = vmatpush1.bf16.msra.mxu0 %v694
      %706 = vmatprep.subr.bf16.mxu0 0
      %707 = vmatpush1.bf16.msra.mxu0 %v695
      %708 = vmatprep.subr.bf16.mxu0 0
      %709 = vmatpush1.bf16.msra.mxu0 0
      %710 = vmatprep.subr.bf16.mxu0 0
      %711 = vmatpush1.bf16.msra.mxu0 0
      %712 = vmatprep.subr.bf16.mxu0 0
      %713 = vmatpush1.bf16.msra.mxu0 0
      %714 = vmatprep.subr.bf16.mxu0 0
      %715 = vmatpush1.bf16.msra.mxu0 0
      %716 = vmatprep.subr.bf16.mxu0 0
      %717 = vmatpush1.bf16.msra.mxu0 0
      %718 = vmatprep.subr.bf16.mxu0 0
      %719 = vmatpush1.bf16.msra.mxu0 0
      %720 = vmatprep.subr.bf16.mxu0 0
      %721 = vmatpush1.bf16.msra.mxu0 0
      %722 = vmatprep.subr.bf16.mxu0 0
      %723 = vmatpush1.bf16.msra.mxu0 0
      %724 = vmatprep.subr.bf16.mxu0 0
      %725 = vmatpush1.bf16.msra.mxu0 0
      %726 = vmatprep.subr.bf16.mxu0 0
      %727 = vmatpush1.bf16.msra.mxu0 0
      %728 = vmatprep.subr.bf16.mxu0 0
      %729 = vmatpush1.bf16.msra.mxu0 0
      %730 = vmatprep.subr.bf16.mxu0 0
      %731 = vmatpush1.bf16.msra.mxu0 0
      %732 = vmatprep.subr.bf16.mxu0 0
      %733 = vmatpush1.bf16.msra.mxu0 0
      %734 = vmatprep.subr.bf16.mxu0 0
      %735 = vmatpush1.bf16.msra.mxu0 0
      %736 = vmatprep.mubr.bf16.mxu0 0
      %737 = vmatmul.mubr.bf16.gmra.mrb[0].mxu0 %v699
      %v738 = vpop.f32.mrb[0].mxu0
      %v739 = vadd.f32 %v684, %v738
      %v740 = vpop.f32.mrb[0].mxu0
      %v741 = vpop.f32.mrb[0].mxu0
      %v742 = vadd.f32 %v684, %v741
      %v743 = vpop.f32.mrb[0].mxu0
      %744 = vmatprep.mubr.bf16.mxu0 0
      %745 = vmatmul.mubr.bf16.gmra.mrb[0].mxu0 %v702
      %v746 = vpop.f32.mrb[0].mxu0
      %v747 = vadd.f32 %v684, %v746
      %v748 = vpop.f32.mrb[0].mxu0
      %v749 = vpop.f32.mrb[0].mxu0
      %v750 = vadd.f32 %v684, %v749
      %v751 = vpop.f32.mrb[0].mxu0
      %752 = vdwg.mxu0
      %v753 = vmax.f32 %v739, 0.0
      %v754 = vmax.f32 %v742, 0.0
      %v755 = vmax.f32 %v747, 0.0
      %v756 = vmax.f32 %v750, 0.0
      %v757 = vld [vmem:[%s7] sm:$0x1]
      %v758 = vunpack.c.l.bf16 %v757
      %v759 = vlaneseq
      %v760 = vshrl.u32 %v759, 7
      %v761 = vsub.s32 0, %v760
      %v762 = vrot.slane %v758, %v761
      %v763 = vmul.f32 %v591, %v762
      %v764 = vmul.f32 %v592, %v762
      %v765 = vmul.f32 %v593, %v762
      %v766 = vmul.f32 %v594, %v762
      %v767 = vsel %vm441, %v763, 0.0
      %768 = vadd.xlane.f32.xlu0 %v767
      %v769 = vpop.xlane.xlu0 %768
      %v770 = vsel %vm441, %v764, 0.0
      %771 = vadd.xlane.f32.xlu0 %v770
      %v772 = vpop.xlane.xlu0 %771
      %v773 = vsel %vm441, %v765, 0.0
      %774 = vadd.xlane.f32.xlu0 %v773
      %v775 = vpop.xlane.xlu0 %774
      %v776 = vsel %vm441, %v766, 0.0
      %777 = vadd.xlane.f32.xlu0 %v776
      %v778 = vpop.xlane.xlu0 %777
      %780 = vrot.lane.b32.xlu0 %v762, 96
      %v781 = vpop.permute.xlu0 %780
      %v783 = vmul.f32 %v753, %v781
      %v784 = vmul.f32 %v754, %v781
      %v785 = vmul.f32 %v755, %v781
      %v786 = vmul.f32 %v756, %v781
      %v787 = vsel %vm441, %v783, 0.0
      %788 = vadd.xlane.f32.xlu0 %v787
      %v789 = vpop.xlane.xlu0 %788
      %v790 = vsel %vm441, %v784, 0.0
      %791 = vadd.xlane.f32.xlu0 %v790
      %v792 = vpop.xlane.xlu0 %791
      %v793 = vsel %vm441, %v785, 0.0
      %794 = vadd.xlane.f32.xlu0 %v793
      %v795 = vpop.xlane.xlu0 %794
      %v796 = vsel %vm441, %v786, 0.0
      %797 = vadd.xlane.f32.xlu0 %v796
      %v798 = vpop.xlane.xlu0 %797
      %v799 = vadd.f32 %v769, %v789
      %v800 = vadd.f32 %v772, %v792
      %v801 = vadd.f32 %v775, %v795
      %v802 = vadd.f32 %v778, %v798
      %v803 = vld [vmem:[#allocation2] sm:$0x1]
      %v805 = vlaneseq
      %v806 = vshrl.u32 %v805, 7
      %v807 = vsub.s32 0, %v806
      %v808 = vrot.slane %v803, %v807
      %v810 = vadd.f32 %v799, %v808
      %v811 = vadd.f32 %v800, %v808
      %v812 = vadd.f32 %v801, %v808
      %v813 = vadd.f32 %v802, %v808
      %vm814 = vcmask 7168
      %815 = vst.msk [vmem:[%s336] sm:$0xff] %vm814, %v810
      %816 = vst.msk [vmem:[%s336 + $0x8] sm:$0xff] %vm814, %v811
      %817 = vst.msk [vmem:[%s336 + $0x10] sm:$0xff] %vm814, %v812
      %818 = vst.msk [vmem:[%s336 + $0x18] sm:$0xff] %vm814, %v813
      %s819 = smul.u32 4, %s22
      %p820 = scmp.lt.s32.totalorder %s819, 7
      %s821 = scalar_select %p820, %s819, 7
      %s822 = smul.addr %s821, 8
      %s823 = scalar_lea.vmem %s9, %s822
      // Predicated region
      $region57: #{tpu_custom_call.1} parent=55 // pred_check
        %p824 = pneg %p234
      $region58: #{tpu_custom_call.1} parent=55 // pred_check_branch
        %826 = sbr.rel (%p824) target = $region60
      $region59: #{tpu_custom_call.1} parent=55 // pred_region
        %s827 = smul.u32 4, %s22
      $region60: #{tpu_custom_call.1} parent=55 // pred_fallthru
        _
    $region56: #{tpu_custom_call.1} parent=5 // pred_fallthru
      _
    %p828 = scmp.le.s32.totalorder 2, %s17
    // Predicated region
    $region61: #{tpu_custom_call.1} parent=5 // pred_check
      %p829 = pneg %p828
    $region62: #{tpu_custom_call.1} parent=5 // pred_check_branch
      %831 = sbr.rel (%p829) target = $region64
    $region63: #{tpu_custom_call.1} parent=5 // pred_region
      %s832 = ssub.s32 %s17, 2
      // Predicated region
      $region65: #{tpu_custom_call.1} parent=63 // pred_check
        %p833 = pneg %p240
      $region66: #{tpu_custom_call.1} parent=63 // pred_check_branch
        %835 = sbr.rel (%p833) target = $region68
      $region67: #{tpu_custom_call.1} parent=63 // pred_region
        %s836 = smul.u32 4, %s23
        %p837 = scmp.lt.s32.totalorder %s836, 7
        %s838 = scalar_select %p837, %s836, 7
        %s839 = smul.addr %s838, 8
        %s840 = scalar_lea.vmem %s9, %s839
      $region68: #{tpu_custom_call.1} parent=63 // pred_fallthru
        _
    $region64: #{tpu_custom_call.1} parent=5 // pred_fallthru
      _
  $region6: #{tpu_custom_call.1} parent=0 // loop_footer
    %s21 = sadd.s32 1, %s17
  $region7: #{tpu_custom_call.1} parent=0 // loop_footer_branch
    %16 = sbr.rel target = $region3
  $region8: #{tpu_custom_call.1} parent=0 // loop_exit
    _

</llo_original>
